<compile_context>
chip_gen: v7x
topology: tpu7x:2x2x1
jax: 0.10.0
libtpu: 0.0.40
codegen_flags: <defaults>
</compile_context>

<pallas_src>
import functools

import jax
import jax.numpy as jnp
from jax.experimental import pallas as pl

GAMMA = 0.99
HIDDEN = 32


def _round_up(n, m):
    return ((n + m - 1) // m) * m


def _slab_layout(in_dim, hidden):
    """Static row offsets of the packed parameter slab (all sections 8-row aligned)."""
    h2 = 2 * hidden
    r_w1 = _round_up(in_dim, 8)
    r_b = 8
    r_w = _round_up(h2, 8)
    off_b1 = r_w1
    off_w2 = off_b1 + r_b
    off_b2 = off_w2 + r_w
    off_w3 = off_b2 + r_b
    off_b3 = off_w3 + r_w
    total = off_b3 + r_b
    return {"w1": 0, "b1": off_b1, "w2": off_w2, "b2": off_b2,
            "w3": off_w3, "b3": off_b3, "total": total,
            "r_w1": r_w1, "r_w": r_w}


def _pad_rows(a, rows):
    pad = rows - a.shape[0]
    if pad == 0:
        return a
    return jnp.concatenate([a, jnp.zeros((pad, a.shape[1]), a.dtype)], axis=0)


def pack_discriminator_params(rew_params, val_params):
    """Fuse reward+value nets into block-diagonal weights and pack into ONE slab.

    Done once per parameter update (wrapper side), not per forward call.
    Returns a float32 array of shape (total_rows, 2*HIDDEN).
    """
    rw1, rb1, rw2, rb2, rw3, rb3 = [jnp.asarray(p, jnp.float32) for p in rew_params]
    vw1, vb1, vw2, vb2, vw3, vb3 = [jnp.asarray(p, jnp.float32) for p in val_params]
    in_dim = rw1.shape[0]       # reward-net input dim (obs_dim [+ act_dim])
    v_in = vw1.shape[0]         # value-net input dim (obs_dim)
    h = rw1.shape[1]
    h2 = 2 * h

    # Layer 1: (in_dim, 2H). Value block zero-padded over any action rows.
    vw1p = jnp.zeros((in_dim, h), jnp.float32).at[:v_in, :].set(vw1)
    w1 = jnp.concatenate([rw1, vw1p], axis=1)
    b1 = jnp.concatenate([rb1, vb1], axis=1)

    # Layer 2: block-diagonal (2H, 2H).
    z = jnp.zeros((h, h), jnp.float32)
    w2 = jnp.concatenate([jnp.concatenate([rw2, z], axis=1),
                          jnp.concatenate([z, vw2], axis=1)], axis=0)
    b2 = jnp.concatenate([rb2, vb2], axis=1)

    # Layer 3: (2H, 2H); only col 0 (reward head) and col 1 (value head) are non-zero.
    w3 = jnp.zeros((h2, h2), jnp.float32)
    w3 = w3.at[:h, 0:1].set(rw3).at[h:, 1:2].set(vw3)
    b3 = jnp.zeros((1, h2), jnp.float32)
    b3 = b3.at[0, 0].set(rb3[0, 0]).at[0, 1].set(vb3[0, 0])

    lay = _slab_layout(in_dim, h)
    slab = jnp.concatenate([
        _pad_rows(w1, lay["r_w1"]),
        _pad_rows(b1, 8),
        _pad_rows(w2, lay["r_w"]),
        _pad_rows(b2, 8),
        _pad_rows(w3, lay["r_w"]),
        _pad_rows(b3, 8),
    ], axis=0)
    assert slab.shape == (lay["total"], h2)
    return slab


def _make_discrim_kernel(batch, in_dim, hidden):
    h2 = 2 * hidden
    lay = _slab_layout(in_dim, hidden)
    o_w1, o_b1, o_w2, o_b2, o_w3, o_b3 = (lay["w1"], lay["b1"], lay["w2"],
                                          lay["b2"], lay["w3"], lay["b3"])

    def kernel(x_ref, logq_ref, slab_ref, disc_ref, logp_ref, logpq_ref):
        x = x_ref[...]                     # (2B, in_dim): rows [0,B) = x_t, [B,2B) = nobs_t
        log_q = logq_ref[...]              # (B, 1)

        # Static, sublane-aligned slices of the single parameter slab.
        w1 = slab_ref[o_w1:o_w1 + in_dim, :]
        b1 = slab_ref[o_b1:o_b1 + 1, :]
        w2 = slab_ref[o_w2:o_w2 + h2, :]
        b2 = slab_ref[o_b2:o_b2 + 1, :]
        w3 = slab_ref[o_w3:o_w3 + h2, :]
        b3 = slab_ref[o_b3:o_b3 + 1, :]

        # ONE fused 3-layer MLP over the stacked batch (reward head = col 0, value = col 1).
        h = jnp.maximum(jnp.dot(x, w1, preferred_element_type=jnp.float32) + b1, 0.0)
        h = jnp.maximum(jnp.dot(h, w2, preferred_element_type=jnp.float32) + b2, 0.0)
        out = jnp.dot(h, w3, preferred_element_type=jnp.float32) + b3    # (2B, 2H)

        r_t = out[:batch, 0:1]             # reward(x_t)
        v_t = out[:batch, 1:2]             # value(obs_t)
        v_tp1 = out[batch:, 1:2]           # value(nobs_t)
        log_p = r_t + GAMMA * v_tp1 - v_t  # (B, 1)

        # torch.cat(dim=0) -> (2B, 1); logsumexp over the size-1 dim is the identity.
        log_pq = jnp.concatenate([log_p, log_q], axis=0)                 # (2B, 1)

        # discrim[i, j] = exp(log_p[i] - log_pq[j]).
        # Single K=1 dot_general for the column->lane move of log_pq; log_p row-broadcast
        # is a free VPU lane splat.
        dn = (((1,), (1,)), ((), ()))
        lpq_b = jax.lax.dot_general(jnp.ones((batch, 1), jnp.float32), log_pq, dn,
                                    preferred_element_type=jnp.float32)  # (B, 2B): lpq[j]
        lp_b = jnp.broadcast_to(log_p, (batch, 2 * batch))               # (B, 2B): lp[i]

        disc_ref[...] = jnp.exp(lp_b - lpq_b)
        # Lane-dense small outputs (row layout); wrapper restores torch layouts.
        logp_ref[...] = lpq_b[0:1, 0:batch]     # (1, B)
        logpq_ref[...] = lpq_b[0:1, :]          # (1, 2B)

    return kernel


@functools.partial(jax.jit, static_argnames=("state_only",))
def discriminator_forward(obs_t, act_t, nobs_t, log_q_tau, packed_params,
                          state_only=True):
    """Pallas forward of Discriminator. Returns (discrim_output, log_p_tau, log_pq)."""
    batch = obs_t.shape[0]
    if not state_only:
        x = jnp.concatenate([obs_t, act_t], axis=1)
        # Value-net block of W1 has zero weights on the action rows, so zero-padded
        # actions for nobs_t keep value(nobs_t) exact.
        nx = jnp.concatenate([nobs_t, jnp.zeros_like(act_t)], axis=1)
    else:
        x = obs_t
        nx = nobs_t
    stacked = jnp.concatenate([x, nx], axis=0)                   # (2B, in_dim)
    in_dim = stacked.shape[1]
    hidden = packed_params.shape[1] // 2

    kernel = _make_discrim_kernel(batch, in_dim, hidden)
    disc, logp_row, logpq_row = pl.pallas_call(
        kernel,
        out_shape=(
            jax.ShapeDtypeStruct((batch, 2 * batch), jnp.float32),   # discrim_output
            jax.ShapeDtypeStruct((1, batch), jnp.float32),           # log_p_tau (row)
            jax.ShapeDtypeStruct((1, 2 * batch), jnp.float32),       # log_pq    (row)
        ),
    )(stacked, log_q_tau, packed_params)

    return disc, logp_row.reshape(batch, 1), logpq_row.reshape(2 * batch)


def init_mlp_params(key, in_dim, hidden_dims=(HIDDEN, HIDDEN)):
    """Deterministic synthetic init (PyTorch-style U(-1/sqrt(fan_in), 1/sqrt(fan_in)))."""
    dims = [in_dim] + list(hidden_dims) + [1]
    params = []
    for i in range(len(dims) - 1):
        key, k_w, k_b = jax.random.split(key, 3)
        bound = 1.0 / (dims[i] ** 0.5)
        w = jax.random.uniform(k_w, (dims[i], dims[i + 1]), jnp.float32, -bound, bound)
        b = jax.random.uniform(k_b, (1, dims[i + 1]), jnp.float32, -bound, bound)
        params += [w, b]
    return params


if __name__ == "__main__":
    key = jax.random.PRNGKey(0)
    B, dim, act_dim = 8, 16, 4   # rew_dim == v_dim == dim because state_only=True

    key, ko, kn, kq, kr, kv = jax.random.split(key, 6)
    obs_t = jax.random.normal(ko, (B, dim), jnp.float32)
    act_t = jnp.zeros((B, act_dim), jnp.float32)   # unused when state_only=True
    nobs_t = jax.random.normal(kn, (B, dim), jnp.float32)
    log_q_tau = jax.random.normal(kq, (B, 1), jnp.float32)

    rew_params = init_mlp_params(kr, dim)
    val_params = init_mlp_params(kv, dim)
    packed = pack_discriminator_params(rew_params, val_params)   # packed ONCE

    disc, log_p_tau, log_pq = discriminator_forward(
        obs_t, act_t, nobs_t, log_q_tau, packed, state_only=True)
    jax.block_until_ready((disc, log_p_tau, log_pq))

    # Pure-JAX reference (un-fused nets) for correctness.
    def mlp_ref(x, p):
        h = jnp.maximum(x @ p[0] + p[1], 0.0)
        h = jnp.maximum(h @ p[2] + p[3], 0.0)
        return h @ p[4] + p[5]

    r = mlp_ref(obs_t, rew_params)
    vt = mlp_ref(obs_t, val_params)
    vtp1 = mlp_ref(nobs_t, val_params)
    lp_ref = (r + GAMMA * vtp1) - vt                              # (B, 1)
    lpq_ref = jnp.concatenate([lp_ref, log_q_tau], axis=0)[:, 0]  # (2B,)
    disc_ref = jnp.exp(lp_ref - lpq_ref[None, :])                 # (B, 2B)

    assert bool(jnp.allclose(log_p_tau, lp_ref, atol=1e-5, rtol=1e-5))
    assert bool(jnp.allclose(log_pq, lpq_ref, atol=1e-5, rtol=1e-5))
    assert bool(jnp.allclose(disc, disc_ref, atol=1e-5, rtol=1e-5))
    print("KERNEL_OK")
</pallas_src>

<mosaic_0001>
module attributes {stable_mosaic.version = 11 : i64} {
  func.func @kernel(%arg0: memref<16x16xf32, #tpu.memory_space<vmem>>, %arg1: memref<8x1xf32, #tpu.memory_space<vmem>>, %arg2: memref<168x64xf32, #tpu.memory_space<vmem>>, %arg3: memref<8x16xf32, #tpu.memory_space<vmem>>, %arg4: memref<1x8xf32, #tpu.memory_space<vmem>>, %arg5: memref<1x16xf32, #tpu.memory_space<vmem>>) attributes {dimension_semantics = [], scalar_prefetch = 0 : i64, scratch_operands = 0 : i64, tpu.core_type = #tpu.core_type<tc>} {
    %c0 = arith.constant 0 : index
    %c0_0 = arith.constant 0 : index
    %0 = vector.load %arg0[%c0, %c0_0] : memref<16x16xf32, #tpu.memory_space<vmem>>, vector<16x16xf32>
    %c0_1 = arith.constant 0 : index
    %c0_2 = arith.constant 0 : index
    %1 = vector.load %arg1[%c0_1, %c0_2] : memref<8x1xf32, #tpu.memory_space<vmem>>, vector<8x1xf32>
    %c0_3 = arith.constant 0 : index
    %c0_4 = arith.constant 0 : index
    %2 = vector.load %arg2[%c0_3, %c0_4] : memref<168x64xf32, #tpu.memory_space<vmem>>, vector<16x64xf32>
    %c16 = arith.constant 16 : index
    %c0_5 = arith.constant 0 : index
    %3 = vector.load %arg2[%c16, %c0_5] : memref<168x64xf32, #tpu.memory_space<vmem>>, vector<1x64xf32>
    %c24 = arith.constant 24 : index
    %c0_6 = arith.constant 0 : index
    %4 = vector.load %arg2[%c24, %c0_6] : memref<168x64xf32, #tpu.memory_space<vmem>>, vector<64x64xf32>
    %c88 = arith.constant 88 : index
    %c0_7 = arith.constant 0 : index
    %5 = vector.load %arg2[%c88, %c0_7] : memref<168x64xf32, #tpu.memory_space<vmem>>, vector<1x64xf32>
    %c96 = arith.constant 96 : index
    %c0_8 = arith.constant 0 : index
    %6 = vector.load %arg2[%c96, %c0_8] : memref<168x64xf32, #tpu.memory_space<vmem>>, vector<64x64xf32>
    %c160 = arith.constant 160 : index
    %c0_9 = arith.constant 0 : index
    %7 = vector.load %arg2[%c160, %c0_9] : memref<168x64xf32, #tpu.memory_space<vmem>>, vector<1x64xf32>
    %cst = arith.constant dense<0.000000e+00> : vector<16x64xf32>
    %8 = tpu.matmul %0, %2, %cst {dimension_numbers = #tpu.dot_dimension_numbers<[1], [0], [0], [1], [0, 0, 1, 1], [], []>} : vector<16x16xf32>, vector<16x64xf32>, vector<16x64xf32> -> vector<16x64xf32>
    %9 = vector.broadcast %3 : vector<1x64xf32> to vector<16x64xf32>
    %10 = arith.addf %8, %9 : vector<16x64xf32>
    %cst_10 = arith.constant 0.000000e+00 : f32
    %11 = vector.broadcast %cst_10 : f32 to vector<16x64xf32>
    %12 = arith.maximumf %10, %11 : vector<16x64xf32>
    %cst_11 = arith.constant dense<0.000000e+00> : vector<16x64xf32>
    %13 = tpu.matmul %12, %4, %cst_11 {dimension_numbers = #tpu.dot_dimension_numbers<[1], [0], [0], [1], [0, 0, 1, 1], [], []>} : vector<16x64xf32>, vector<64x64xf32>, vector<16x64xf32> -> vector<16x64xf32>
    %14 = vector.broadcast %5 : vector<1x64xf32> to vector<16x64xf32>
    %15 = arith.addf %13, %14 : vector<16x64xf32>
    %cst_12 = arith.constant 0.000000e+00 : f32
    %16 = vector.broadcast %cst_12 : f32 to vector<16x64xf32>
    %17 = arith.maximumf %15, %16 : vector<16x64xf32>
    %cst_13 = arith.constant dense<0.000000e+00> : vector<16x64xf32>
    %18 = tpu.matmul %17, %6, %cst_13 {dimension_numbers = #tpu.dot_dimension_numbers<[1], [0], [0], [1], [0, 0, 1, 1], [], []>} : vector<16x64xf32>, vector<64x64xf32>, vector<16x64xf32> -> vector<16x64xf32>
    %19 = vector.broadcast %7 : vector<1x64xf32> to vector<16x64xf32>
    %20 = arith.addf %18, %19 : vector<16x64xf32>
    %21 = vector.extract_strided_slice %20 {offsets = [0, 0], sizes = [8, 1], strides = [1, 1]} : vector<16x64xf32> to vector<8x1xf32>
    %22 = vector.extract_strided_slice %20 {offsets = [0, 1], sizes = [8, 1], strides = [1, 1]} : vector<16x64xf32> to vector<8x1xf32>
    %23 = vector.extract_strided_slice %20 {offsets = [8, 1], sizes = [8, 1], strides = [1, 1]} : vector<16x64xf32> to vector<8x1xf32>
    %cst_14 = arith.constant 9.900000e-01 : f32
    %24 = vector.broadcast %cst_14 : f32 to vector<8x1xf32>
    %25 = arith.mulf %24, %23 : vector<8x1xf32>
    %26 = arith.addf %21, %25 : vector<8x1xf32>
    %27 = arith.subf %26, %22 : vector<8x1xf32>
    %28 = tpu.concatenate %27, %1 in 0 : vector<8x1xf32>, vector<8x1xf32> -> vector<16x1xf32>
    %cst_15 = arith.constant 1.000000e+00 : f32
    %29 = vector.broadcast %cst_15 : f32 to vector<8x1xf32>
    %cst_16 = arith.constant dense<0.000000e+00> : vector<8x16xf32>
    %30 = tpu.matmul %29, %28, %cst_16 {dimension_numbers = #tpu.dot_dimension_numbers<[1], [1], [0], [0], [0, 0, 1, 0], [], []>} : vector<8x1xf32>, vector<16x1xf32>, vector<8x16xf32> -> vector<8x16xf32>
    %31 = vector.shape_cast %27 : vector<8x1xf32> to vector<8x1xf32>
    %32 = vector.broadcast %31 : vector<8x1xf32> to vector<8x16xf32>
    %33 = arith.subf %32, %30 : vector<8x16xf32>
    %34 = math.exp %33 : vector<8x16xf32>
    %c0_17 = arith.constant 0 : index
    %c0_18 = arith.constant 0 : index
    %35 = vector.load %arg3[%c0_17, %c0_18] : memref<8x16xf32, #tpu.memory_space<vmem>>, vector<8x16xf32>
    tpu.vector_store %arg3[%c0_17, %c0_18], %34 {strides = array<i32>} : memref<8x16xf32, #tpu.memory_space<vmem>>, vector<8x16xf32>,
    %36 = vector.extract_strided_slice %30 {offsets = [0, 0], sizes = [1, 8], strides = [1, 1]} : vector<8x16xf32> to vector<1x8xf32>
    %c0_19 = arith.constant 0 : index
    %c0_20 = arith.constant 0 : index
    %37 = vector.load %arg4[%c0_19, %c0_20] : memref<1x8xf32, #tpu.memory_space<vmem>>, vector<1x8xf32>
    tpu.vector_store %arg4[%c0_19, %c0_20], %36 {strides = array<i32>} : memref<1x8xf32, #tpu.memory_space<vmem>>, vector<1x8xf32>,
    %38 = vector.extract_strided_slice %30 {offsets = [0, 0], sizes = [1, 16], strides = [1, 1]} : vector<8x16xf32> to vector<1x16xf32>
    %c0_21 = arith.constant 0 : index
    %c0_22 = arith.constant 0 : index
    %39 = vector.load %arg5[%c0_21, %c0_22] : memref<1x16xf32, #tpu.memory_space<vmem>>, vector<1x16xf32>
    tpu.vector_store %arg5[%c0_21, %c0_22], %38 {strides = array<i32>} : memref<1x16xf32, #tpu.memory_space<vmem>>, vector<1x16xf32>,
    return
  }
}

</mosaic_0001>

<llo_original>
// kernel: discriminator_forward.1
$region0: #{discriminator_forward.1}
  #allocation0 [shape = 'u32[]', space=smem, size = 0x4, offset = 0x4, fixed_abs, tag = 'smem constant byte address 0x4 - core index']
  #allocation1 [shape = 'u32[144,128]{1,0:T(1,128)}', space=vmem, size = 0x12000, scoped, tag = 'internal scratch']
  %s0 = inlined_call_operand.vmem [shape: f32[16,16], index: 0, kind: input, shape index: {}]
  %s1 = inlined_call_operand.vmem [shape: f32[8,1], index: 1, kind: input, shape index: {}]
  %s2 = inlined_call_operand.vmem [shape: f32[168,64], index: 2, kind: input, shape index: {}]
  %s3 = inlined_call_operand.hbm [shape: f32[8,16], index: 3, kind: output, shape index: {0}]
  %s4 = inlined_call_operand.hbm [shape: f32[1,8], index: 4, kind: output, shape index: {1}]
  %s5 = inlined_call_operand.hbm [shape: f32[1,16], index: 5, kind: output, shape index: {2}]
  %6 = xla_tuple %s3, %s4, %s5
  %s7 = sld [smem:[#allocation0]]
  $region38: #{discriminator_forward.1} parent=0
    _
  %s9 = ssub.s32 1, %s7
  %s10 = scalar_select 0, %s9, %s7
  $region1: #{discriminator_forward.1} parent=0
    #allocation2 [shape = 'u8[4096]{0}', space=vmem, size = 0x1000, scoped, tag = 'output window, operand 0, single buffered']
    #allocation3 [shape = 's32[1]{0}', space=sflag, size = 0x4, scoped, tag = 'scoped memory for discriminator_forward.1']
    #allocation4 [shape = 'u8[512]{0}', space=vmem, size = 0x400, scoped, tag = 'output window, operand 1, single buffered']
    #allocation5 [shape = 's32[1]{0}', space=sflag, size = 0x4, scoped, tag = 'scoped memory for discriminator_forward.1']
    #allocation6 [shape = 'u8[512]{0}', space=vmem, size = 0x400, scoped, tag = 'output window, operand 2, single buffered']
    %11 = vsyncpa [#allocation3], 0
    %12 = vsyncpa [#allocation5], 0
    // Predicated region
    $region2: #{discriminator_forward.1} parent=1 // pred_check
      _
    $region3: #{discriminator_forward.1} parent=1 // pred_check_branch
      %14 = sbr.rel (0) target = $region5
    $region4: #{discriminator_forward.1} parent=1 // pred_region
      _
    $region5: #{discriminator_forward.1} parent=1 // pred_fallthru
      _
    // Predicated region
    $region6: #{discriminator_forward.1} parent=1 // pred_check
      _
    $region7: #{discriminator_forward.1} parent=1 // pred_check_branch
      %16 = sbr.rel (0) target = $region9
    $region8: #{discriminator_forward.1} parent=1 // pred_region
      _
    $region9: #{discriminator_forward.1} parent=1 // pred_fallthru
      _
    // Predicated region
    $region10: #{discriminator_forward.1} parent=1 // pred_check
      _
    $region11: #{discriminator_forward.1} parent=1 // pred_check_branch
      %18 = sbr.rel (0) target = $region13
    $region12: #{discriminator_forward.1} parent=1 // pred_region
      _
    $region13: #{discriminator_forward.1} parent=1 // pred_fallthru
      _
    %v19 = vld [vmem:[%s0] sm:$0xff]
    %v20 = vld [vmem:[%s0 + $0x8] sm:$0xff]
    %v21 = vld [vmem:[%s1] sm:$0xff]
    %v22 = vld [vmem:[%s2] sm:$0xff]
    %v23 = vld [vmem:[%s2 + $0x8] sm:$0xff]
    %v24 = vld [vmem:[%s2 + $0x10] sm:$0x1]
    %v25 = vld [vmem:[%s2 + $0x18] sm:$0xff]
    %v26 = vld [vmem:[%s2 + $0x20] sm:$0xff]
    %v27 = vld [vmem:[%s2 + $0x28] sm:$0xff]
    %v28 = vld [vmem:[%s2 + $0x30] sm:$0xff]
    %v29 = vld [vmem:[%s2 + $0x38] sm:$0xff]
    %v30 = vld [vmem:[%s2 + $0x40] sm:$0xff]
    %v31 = vld [vmem:[%s2 + $0x48] sm:$0xff]
    %v32 = vld [vmem:[%s2 + $0x50] sm:$0xff]
    %v33 = vld [vmem:[%s2 + $0x58] sm:$0x1]
    %v34 = vld [vmem:[%s2 + $0x60] sm:$0xff]
    %v35 = vld [vmem:[%s2 + $0x68] sm:$0xff]
    %v36 = vld [vmem:[%s2 + $0x70] sm:$0xff]
    %v37 = vld [vmem:[%s2 + $0x78] sm:$0xff]
    %v38 = vld [vmem:[%s2 + $0x80] sm:$0xff]
    %v39 = vld [vmem:[%s2 + $0x88] sm:$0xff]
    %v40 = vld [vmem:[%s2 + $0x90] sm:$0xff]
    %v41 = vld [vmem:[%s2 + $0x98] sm:$0xff]
    %v42 = vld [vmem:[%s2 + $0xa0] sm:$0x1]
    %v43 = vlaneseq
    %v44 = vshrl.u32 %v43, 7
    %v45 = vsub.s32 0, %v44
    %v46 = vrot.slane %v24, %v45
    %vm47 = vcmask 130048
    %v49 = vsel %vm47, %v19, 0
    %v52 = vsel %vm47, %v20, 0
    %54 = vmatprep.subr.mxu0 0.0
    %55 = vmatpush1.msra.mxu0 %v22
    %56 = vmatprep.subr.mxu0 0.0
    %57 = vmatpush1.msra.mxu0 %v23
    %58 = vmatprep.subr.mxu0 0.0
    %59 = vmatpush1.msra.mxu0 0.0
    %60 = vmatprep.subr.mxu0 0.0
    %61 = vmatpush1.msra.mxu0 0.0
    %62 = vmatprep.subr.mxu0 0.0
    %63 = vmatpush1.msra.mxu0 0.0
    %64 = vmatprep.subr.mxu0 0.0
    %65 = vmatpush1.msra.mxu0 0.0
    %66 = vmatprep.subr.mxu0 0.0
    %67 = vmatpush1.msra.mxu0 0.0
    %68 = vmatprep.subr.mxu0 0.0
    %69 = vmatpush1.msra.mxu0 0.0
    %70 = vmatprep.subr.mxu0 0.0
    %71 = vmatpush1.msra.mxu0 0.0
    %72 = vmatprep.subr.mxu0 0.0
    %73 = vmatpush1.msra.mxu0 0.0
    %74 = vmatprep.subr.mxu0 0.0
    %75 = vmatpush1.msra.mxu0 0.0
    %76 = vmatprep.subr.mxu0 0.0
    %77 = vmatpush1.msra.mxu0 0.0
    %78 = vmatprep.subr.mxu0 0.0
    %79 = vmatpush1.msra.mxu0 0.0
    %80 = vmatprep.subr.mxu0 0.0
    %81 = vmatpush1.msra.mxu0 0.0
    %82 = vmatprep.subr.mxu0 0.0
    %83 = vmatpush1.msra.mxu0 0.0
    %84 = vmatprep.subr.mxu0 0.0
    %85 = vmatpush1.msra.mxu0 0.0
    %86 = vmatprep.subr.mxu0 0.0
    %87 = vmatpush1.msra.mxu0 0.0
    %88 = vmatprep.subr.mxu0 0.0
    %89 = vmatpush1.msra.mxu0 0.0
    %90 = vmatprep.subr.mxu0 0.0
    %91 = vmatpush1.msra.mxu0 0.0
    %92 = vmatprep.subr.mxu0 0.0
    %93 = vmatpush1.msra.mxu0 0.0
    %94 = vmatprep.subr.mxu0 0.0
    %95 = vmatpush1.msra.mxu0 0.0
    %96 = vmatprep.subr.mxu0 0.0
    %97 = vmatpush1.msra.mxu0 0.0
    %98 = vmatprep.subr.mxu0 0.0
    %99 = vmatpush1.msra.mxu0 0.0
    %100 = vmatprep.subr.mxu0 0.0
    %101 = vmatpush1.msra.mxu0 0.0
    %102 = vmatprep.subr.mxu0 0.0
    %103 = vmatpush1.msra.mxu0 0.0
    %104 = vmatprep.subr.mxu0 0.0
    %105 = vmatpush1.msra.mxu0 0.0
    %106 = vmatprep.subr.mxu0 0.0
    %107 = vmatpush1.msra.mxu0 0.0
    %108 = vmatprep.subr.mxu0 0.0
    %109 = vmatpush1.msra.mxu0 0.0
    %110 = vmatprep.subr.mxu0 0.0
    %111 = vmatpush1.msra.mxu0 0.0
    %112 = vmatprep.subr.mxu0 0.0
    %113 = vmatpush1.msra.mxu0 0.0
    %114 = vmatprep.subr.mxu0 0.0
    %115 = vmatpush1.msra.mxu0 0.0
    %116 = vmatprep.subr.mxu0 0.0
    %117 = vmatpush1.msra.mxu0 0.0
    %118 = vmatprep.mubr.f32.mxu0 0.0
    %119 = vmatmul.mubr.f32.gmra.mrb[0].mxu0 %v49
    %v120 = vpop.f32.mrb[0].mxu0
    %v121 = vadd.f32 %v46, %v120
    %v122 = vpop.f32.mrb[0].mxu0
    %123 = vmatprep.mubr.f32.mxu0 0.0
    %124 = vmatmul.mubr.f32.gmra.mrb[0].mxu0 %v52
    %v125 = vpop.f32.mrb[0].mxu0
    %v126 = vadd.f32 %v46, %v125
    %v127 = vpop.f32.mrb[0].mxu0
    %128 = vdwg.mxu0
    %v129 = vmax.f32 %v121, 0.0
    %v130 = vmax.f32 %v126, 0.0
    %v131 = vlaneseq
    %v132 = vshrl.u32 %v131, 7
    %v133 = vsub.s32 0, %v132
    %v134 = vrot.slane %v33, %v133
    %vm135 = vcmask 523264
    %v137 = vsel %vm135, %v129, 0
    %v140 = vsel %vm135, %v130, 0
    %142 = vmatprep.subr.mxu0 0.0
    %143 = vmatpush1.msra.mxu0 %v25
    %144 = vmatprep.subr.mxu0 0.0
    %145 = vmatpush1.msra.mxu0 %v26
    %146 = vmatprep.subr.mxu0 0.0
    %147 = vmatpush1.msra.mxu0 %v27
    %148 = vmatprep.subr.mxu0 0.0
    %149 = vmatpush1.msra.mxu0 %v28
    %150 = vmatprep.subr.mxu0 0.0
    %151 = vmatpush1.msra.mxu0 %v29
    %152 = vmatprep.subr.mxu0 0.0
    %153 = vmatpush1.msra.mxu0 %v30
    %154 = vmatprep.subr.mxu0 0.0
    %155 = vmatpush1.msra.mxu0 %v31
    %156 = vmatprep.subr.mxu0 0.0
    %157 = vmatpush1.msra.mxu0 %v32
    %158 = vmatprep.subr.mxu0 0.0
    %159 = vmatpush1.msra.mxu0 0.0
    %160 = vmatprep.subr.mxu0 0.0
    %161 = vmatpush1.msra.mxu0 0.0
    %162 = vmatprep.subr.mxu0 0.0
    %163 = vmatpush1.msra.mxu0 0.0
    %164 = vmatprep.subr.mxu0 0.0
    %165 = vmatpush1.msra.mxu0 0.0
    %166 = vmatprep.subr.mxu0 0.0
    %167 = vmatpush1.msra.mxu0 0.0
    %168 = vmatprep.subr.mxu0 0.0
    %169 = vmatpush1.msra.mxu0 0.0
    %170 = vmatprep.subr.mxu0 0.0
    %171 = vmatpush1.msra.mxu0 0.0
    %172 = vmatprep.subr.mxu0 0.0
    %173 = vmatpush1.msra.mxu0 0.0
    %174 = vmatprep.subr.mxu0 0.0
    %175 = vmatpush1.msra.mxu0 0.0
    %176 = vmatprep.subr.mxu0 0.0
    %177 = vmatpush1.msra.mxu0 0.0
    %178 = vmatprep.subr.mxu0 0.0
    %179 = vmatpush1.msra.mxu0 0.0
    %180 = vmatprep.subr.mxu0 0.0
    %181 = vmatpush1.msra.mxu0 0.0
    %182 = vmatprep.subr.mxu0 0.0
    %183 = vmatpush1.msra.mxu0 0.0
    %184 = vmatprep.subr.mxu0 0.0
    %185 = vmatpush1.msra.mxu0 0.0
    %186 = vmatprep.subr.mxu0 0.0
    %187 = vmatpush1.msra.mxu0 0.0
    %188 = vmatprep.subr.mxu0 0.0
    %189 = vmatpush1.msra.mxu0 0.0
    %190 = vmatprep.subr.mxu0 0.0
    %191 = vmatpush1.msra.mxu0 0.0
    %192 = vmatprep.subr.mxu0 0.0
    %193 = vmatpush1.msra.mxu0 0.0
    %194 = vmatprep.subr.mxu0 0.0
    %195 = vmatpush1.msra.mxu0 0.0
    %196 = vmatprep.subr.mxu0 0.0
    %197 = vmatpush1.msra.mxu0 0.0
    %198 = vmatprep.subr.mxu0 0.0
    %199 = vmatpush1.msra.mxu0 0.0
    %200 = vmatprep.subr.mxu0 0.0
    %201 = vmatpush1.msra.mxu0 0.0
    %202 = vmatprep.subr.mxu0 0.0
    %203 = vmatpush1.msra.mxu0 0.0
    %204 = vmatprep.subr.mxu0 0.0
    %205 = vmatpush1.msra.mxu0 0.0
    %206 = vmatprep.mubr.f32.mxu0 0.0
    %207 = vmatmul.mubr.f32.gmra.mrb[0].mxu0 %v137
    %v208 = vpop.f32.mrb[0].mxu0
    %v209 = vadd.f32 %v134, %v208
    %v210 = vpop.f32.mrb[0].mxu0
    %211 = vmatprep.mubr.f32.mxu0 0.0
    %212 = vmatmul.mubr.f32.gmra.mrb[0].mxu0 %v140
    %v213 = vpop.f32.mrb[0].mxu0
    %v214 = vadd.f32 %v134, %v213
    %v215 = vpop.f32.mrb[0].mxu0
    %216 = vdwg.mxu0
    %v217 = vmax.f32 %v209, 0.0
    %v218 = vmax.f32 %v214, 0.0
    %v219 = vlaneseq
    %v220 = vshrl.u32 %v219, 7
    %v221 = vsub.s32 0, %v220
    %v222 = vrot.slane %v42, %v221
    %v224 = vsel %vm135, %v217, 0
    %v227 = vsel %vm135, %v218, 0
    %229 = vmatprep.subr.mxu0 0.0
    %230 = vmatpush1.msra.mxu0 %v34
    %231 = vmatprep.subr.mxu0 0.0
    %232 = vmatpush1.msra.mxu0 %v35
    %233 = vmatprep.subr.mxu0 0.0
    %234 = vmatpush1.msra.mxu0 %v36
    %235 = vmatprep.subr.mxu0 0.0
    %236 = vmatpush1.msra.mxu0 %v37
    %237 = vmatprep.subr.mxu0 0.0
    %238 = vmatpush1.msra.mxu0 %v38
    %239 = vmatprep.subr.mxu0 0.0
    %240 = vmatpush1.msra.mxu0 %v39
    %241 = vmatprep.subr.mxu0 0.0
    %242 = vmatpush1.msra.mxu0 %v40
    %243 = vmatprep.subr.mxu0 0.0
    %244 = vmatpush1.msra.mxu0 %v41
    %245 = vmatprep.subr.mxu0 0.0
    %246 = vmatpush1.msra.mxu0 0.0
    %247 = vmatprep.subr.mxu0 0.0
    %248 = vmatpush1.msra.mxu0 0.0
    %249 = vmatprep.subr.mxu0 0.0
    %250 = vmatpush1.msra.mxu0 0.0
    %251 = vmatprep.subr.mxu0 0.0
    %252 = vmatpush1.msra.mxu0 0.0
    %253 = vmatprep.subr.mxu0 0.0
    %254 = vmatpush1.msra.mxu0 0.0
    %255 = vmatprep.subr.mxu0 0.0
    %256 = vmatpush1.msra.mxu0 0.0
    %257 = vmatprep.subr.mxu0 0.0
    %258 = vmatpush1.msra.mxu0 0.0
    %259 = vmatprep.subr.mxu0 0.0
    %260 = vmatpush1.msra.mxu0 0.0
    %261 = vmatprep.subr.mxu0 0.0
    %262 = vmatpush1.msra.mxu0 0.0
    %263 = vmatprep.subr.mxu0 0.0
    %264 = vmatpush1.msra.mxu0 0.0
    %265 = vmatprep.subr.mxu0 0.0
    %266 = vmatpush1.msra.mxu0 0.0
    %267 = vmatprep.subr.mxu0 0.0
    %268 = vmatpush1.msra.mxu0 0.0
    %269 = vmatprep.subr.mxu0 0.0
    %270 = vmatpush1.msra.mxu0 0.0
    %271 = vmatprep.subr.mxu0 0.0
    %272 = vmatpush1.msra.mxu0 0.0
    %273 = vmatprep.subr.mxu0 0.0
    %274 = vmatpush1.msra.mxu0 0.0
    %275 = vmatprep.subr.mxu0 0.0
    %276 = vmatpush1.msra.mxu0 0.0
    %277 = vmatprep.subr.mxu0 0.0
    %278 = vmatpush1.msra.mxu0 0.0
    %279 = vmatprep.subr.mxu0 0.0
    %280 = vmatpush1.msra.mxu0 0.0
    %281 = vmatprep.subr.mxu0 0.0
    %282 = vmatpush1.msra.mxu0 0.0
    %283 = vmatprep.subr.mxu0 0.0
    %284 = vmatpush1.msra.mxu0 0.0
    %285 = vmatprep.subr.mxu0 0.0
    %286 = vmatpush1.msra.mxu0 0.0
    %287 = vmatprep.subr.mxu0 0.0
    %288 = vmatpush1.msra.mxu0 0.0
    %289 = vmatprep.subr.mxu0 0.0
    %290 = vmatpush1.msra.mxu0 0.0
    %291 = vmatprep.subr.mxu0 0.0
    %292 = vmatpush1.msra.mxu0 0.0
    %293 = vmatprep.mubr.f32.mxu0 0.0
    %294 = vmatmul.mubr.f32.gmra.mrb[0].mxu0 %v224
    %v295 = vpop.f32.mrb[0].mxu0
    %v296 = vadd.f32 %v222, %v295
    %v297 = vpop.f32.mrb[0].mxu0
    %298 = vmatprep.mubr.f32.mxu0 0.0
    %299 = vmatmul.mubr.f32.gmra.mrb[0].mxu0 %v227
    %v300 = vpop.f32.mrb[0].mxu0
    %v301 = vadd.f32 %v222, %v300
    %v302 = vpop.f32.mrb[0].mxu0
    %303 = vdwg.mxu0
    %v304 = vmul.f32 %v301, 0.99
    %306 = vrot.lane.b32.xlu0 %v304, 127
    %v307 = vpop.permute.xlu0 %306
    %v309 = vadd.f32 %v296, %v307
    %311 = vrot.lane.b32.xlu0 %v296, 127
    %v312 = vpop.permute.xlu0 %311
    %v314 = vsub.f32 %v309, %v312
    %vm315 = vcmask 7168
    %v317 = vsel %vm315, 1.0, 0
    %v320 = vsel %vm315, %v314, 0
    %v323 = vsel %vm315, %v21, 0
    %325 = vmatprep.subr.mxu0 0.0
    %326 = vmatpush1.xpose.msra.mxu0 %v320
    %327 = vmatprep.subr.mxu0 0.0
    %328 = vmatpush1.xpose.msra.mxu0 %v323
    %329 = vmatprep.subr.mxu0 0.0
    %330 = vmatpush1.xpose.msra.mxu0 0.0
    %331 = vmatprep.subr.mxu0 0.0
    %332 = vmatpush1.xpose.msra.mxu0 0.0
    %333 = vmatprep.subr.mxu0 0.0
    %334 = vmatpush1.xpose.msra.mxu0 0.0
    %335 = vmatprep.subr.mxu0 0.0
    %336 = vmatpush1.xpose.msra.mxu0 0.0
    %337 = vmatprep.subr.mxu0 0.0
    %338 = vmatpush1.xpose.msra.mxu0 0.0
    %339 = vmatprep.subr.mxu0 0.0
    %340 = vmatpush1.xpose.msra.mxu0 0.0
    %341 = vmatprep.subr.mxu0 0.0
    %342 = vmatpush1.xpose.msra.mxu0 0.0
    %343 = vmatprep.subr.mxu0 0.0
    %344 = vmatpush1.xpose.msra.mxu0 0.0
    %345 = vmatprep.subr.mxu0 0.0
    %346 = vmatpush1.xpose.msra.mxu0 0.0
    %347 = vmatprep.subr.mxu0 0.0
    %348 = vmatpush1.xpose.msra.mxu0 0.0
    %349 = vmatprep.subr.mxu0 0.0
    %350 = vmatpush1.xpose.msra.mxu0 0.0
    %351 = vmatprep.subr.mxu0 0.0
    %352 = vmatpush1.xpose.msra.mxu0 0.0
    %353 = vmatprep.subr.mxu0 0.0
    %354 = vmatpush1.xpose.msra.mxu0 0.0
    %355 = vmatprep.subr.mxu0 0.0
    %356 = vmatpush1.xpose.msra.mxu0 0.0
    %357 = vmatprep.subr.mxu0 0.0
    %358 = vmatpush1.xpose.msra.mxu0 0.0
    %359 = vmatprep.subr.mxu0 0.0
    %360 = vmatpush1.xpose.msra.mxu0 0.0
    %361 = vmatprep.subr.mxu0 0.0
    %362 = vmatpush1.xpose.msra.mxu0 0.0
    %363 = vmatprep.subr.mxu0 0.0
    %364 = vmatpush1.xpose.msra.mxu0 0.0
    %365 = vmatprep.subr.mxu0 0.0
    %366 = vmatpush1.xpose.msra.mxu0 0.0
    %367 = vmatprep.subr.mxu0 0.0
    %368 = vmatpush1.xpose.msra.mxu0 0.0
    %369 = vmatprep.subr.mxu0 0.0
    %370 = vmatpush1.xpose.msra.mxu0 0.0
    %371 = vmatprep.subr.mxu0 0.0
    %372 = vmatpush1.xpose.msra.mxu0 0.0
    %373 = vmatprep.subr.mxu0 0.0
    %374 = vmatpush1.xpose.msra.mxu0 0.0
    %375 = vmatprep.subr.mxu0 0.0
    %376 = vmatpush1.xpose.msra.mxu0 0.0
    %377 = vmatprep.subr.mxu0 0.0
    %378 = vmatpush1.xpose.msra.mxu0 0.0
    %379 = vmatprep.subr.mxu0 0.0
    %380 = vmatpush1.xpose.msra.mxu0 0.0
    %381 = vmatprep.subr.mxu0 0.0
    %382 = vmatpush1.xpose.msra.mxu0 0.0
    %383 = vmatprep.subr.mxu0 0.0
    %384 = vmatpush1.xpose.msra.mxu0 0.0
    %385 = vmatprep.subr.mxu0 0.0
    %386 = vmatpush1.xpose.msra.mxu0 0.0
    %387 = vmatprep.subr.mxu0 0.0
    %388 = vmatpush1.xpose.msra.mxu0 0.0
    %389 = vmatprep.mubr.f32.mxu0 0.0
    %390 = vmatmul.mubr.f32.gmra.mrb[0].mxu0 %v317
    %v391 = vpop.f32.mrb[0].mxu0
    %v392 = vadd.f32 0.0, %v391
    %v393 = vpop.f32.mrb[0].mxu0
    %394 = vdwg.mxu0
    %395 = vset.pattern.permute.xlu0 0
    %396 = vperm.xlu0 %395, %v314
    %v397 = vpop.permute.xlu0 %396
    %v399 = vsub.f32 %v397, %v392
    %v400 = vmul.f32 %v399, 1.442695
    %v401 = vpow.pop %v400
    %402 = vst.msk [vmem:[#allocation2] sm:$0xff] %vm47, %v401
    %vm403 = vcmask 57344
    %404 = vst.msk [vmem:[#allocation4] sm:$0x1] %vm403, %v392
    %vm405 = vcmask 122880
    %406 = vst.msk [vmem:[#allocation6] sm:$0x1] %vm405, %v392
    // Predicated region
    $region14: #{discriminator_forward.1} parent=1 // pred_check
      _
    $region15: #{discriminator_forward.1} parent=1 // pred_check_branch
      %408 = sbr.rel (0) target = $region17
    $region16: #{discriminator_forward.1} parent=1 // pred_region
      %s410 = ssub.s32 128, 128
      %411 = vsyncadd [#allocation3], %s410
      %s413 = sshll.u32 [#allocation2], 4
      %s414 = int_to_ptr.vmem [resolvable:$true] %s413
      %416 = dma.vmem_to_hbm [thread:$0]  %s414, 128, %s3, [#allocation3]
    $region17: #{discriminator_forward.1} parent=1 // pred_fallthru
      _
    // Predicated region
    $region18: #{discriminator_forward.1} parent=1 // pred_check
      _
    $region19: #{discriminator_forward.1} parent=1 // pred_check_branch
      %418 = sbr.rel (0) target = $region21
    $region20: #{discriminator_forward.1} parent=1 // pred_region
      %s420 = ssub.s32 16, 16
      %421 = vsyncadd [#allocation5], %s420
      %s423 = sshll.u32 [#allocation4], 4
      %s424 = int_to_ptr.vmem [resolvable:$true] %s423
      %426 = dma.vmem_to_hbm [thread:$0]  %s424, 16, %s4, [#allocation5]
    $region21: #{discriminator_forward.1} parent=1 // pred_fallthru
      _
    // Predicated region
    $region22: #{discriminator_forward.1} parent=1 // pred_check
      _
    $region23: #{discriminator_forward.1} parent=1 // pred_check_branch
      %428 = sbr.rel (0) target = $region25
    $region24: #{discriminator_forward.1} parent=1 // pred_region
      %s430 = ssub.s32 16, 16
      %431 = vsyncadd [#allocation5], %s430
      %s433 = sshll.u32 [#allocation6], 4
      %s434 = int_to_ptr.vmem [resolvable:$true] %s433
      %436 = dma.vmem_to_hbm [thread:$0]  %s434, 16, %s5, [#allocation5]
    $region25: #{discriminator_forward.1} parent=1 // pred_fallthru
      _
    // Predicated region
    $region26: #{discriminator_forward.1} parent=1 // pred_check
      _
    $region27: #{discriminator_forward.1} parent=1 // pred_check_branch
      %438 = sbr.rel (0) target = $region29
    $region28: #{discriminator_forward.1} parent=1 // pred_region
      %439 = dma.done [#allocation3], 128
    $region29: #{discriminator_forward.1} parent=1 // pred_fallthru
      _
    // Predicated region
    $region30: #{discriminator_forward.1} parent=1 // pred_check
      _
    $region31: #{discriminator_forward.1} parent=1 // pred_check_branch
      %441 = sbr.rel (0) target = $region33
    $region32: #{discriminator_forward.1} parent=1 // pred_region
      %442 = dma.done [#allocation5], 16
    $region33: #{discriminator_forward.1} parent=1 // pred_fallthru
      _
    // Predicated region
    $region34: #{discriminator_forward.1} parent=1 // pred_check
      _
    $region35: #{discriminator_forward.1} parent=1 // pred_check_branch
      %444 = sbr.rel (0) target = $region37
    $region36: #{discriminator_forward.1} parent=1 // pred_region
      %445 = dma.done [#allocation5], 16
    $region37: #{discriminator_forward.1} parent=1 // pred_fallthru
      _
    %446 = vsyncpa [#allocation3], 1
    %447 = vsyncpa [#allocation5], 1

</llo_original>
